<compile_context>
chip_gen: v7x
topology: tpu7x:2x2x1
jax: 0.10.0
libtpu: 0.0.40
codegen_flags: <defaults>
</compile_context>

<pallas_src>
import functools

import jax
import jax.numpy as jnp
from jax.experimental import pallas as pl
from jax.experimental.pallas import tpu as pltpu


_LANE = 128                       # output last dim should be a multiple of this
_VMEM_BUDGET = 48 * 1024 * 1024   # per-step tile budget: fits v7x (64 MiB phys)
                                  # with headroom, > v5e (16 MiB) / v6e (32 MiB)
                                  # default scoped limits.


def _round_up(x, m):
    return (x + m - 1) // m * m


def _choose_tm(M, dtype, d_padded, r):
    """Pick a row-tile size: big enough to hit HBM roofline, small enough that
    double-buffered in/out tiles + resident weights fit the VMEM budget."""
    itemsize = jnp.dtype(dtype).itemsize
    row_align = 16 if itemsize == 2 else 8
    target = 1024 if itemsize == 2 else 512
    if M <= target:
        return M  # a block equal to the full array dim is always legal
    resident = 2 * d_padded * r * itemsize + (r + d_padded) * 4  # Wa, Wb, biases
    budget = _VMEM_BUDGET - resident
    tm = budget // (4 * d_padded * itemsize)  # 2 buffers x (input + output) tile
    tm = max(row_align, min(target, int(tm)))
    return (tm // row_align) * row_align


def _rep_adapter_kernel(x_ref, wa_ref, ba_ref, wb_ref, bb_ref, o_ref, *, scale):
    # x_ref: (tm, Dp) model dtype   wa_ref: (Dp, r)   ba_ref: (1, r)  f32
    # wb_ref: (r, Dp)               bb_ref: (1, Dp) f32   o_ref: (tm, Dp)
    x = x_ref[...]  # keep model dtype: bf16 feeds the MXU natively, no upcast
    # conv_A (1x1 Conv1d) == per-token x @ Wa^T + ba, f32 accumulation on MXU.
    h = jnp.dot(x, wa_ref[...], preferred_element_type=jnp.float32) + ba_ref[...]
    # TODO(synk): nn.Dropout(0.1) is identity in eval/inference mode; training-mode
    # stochastic masking is not implemented here.
    h = h.astype(wb_ref.dtype)
    # conv_B (1x1 Conv1d, groups=1) == h @ Wb^T + bb.
    y = jnp.dot(h, wb_ref[...], preferred_element_type=jnp.float32) + bb_ref[...]
    # Residual add in f32, cast once on the way out.
    o_ref[...] = (y * scale + x.astype(jnp.float32)).astype(o_ref.dtype)


def prepare_rep_adapter_params(conv_a_w, conv_a_b, conv_b_w, conv_b_b,
                               dtype=jnp.float32):
    """Convert PyTorch Conv1d-layout weights (1x1 kernels squeezed) into the
    pre-transposed layout the kernel consumes.  Do this ONCE at load time so no
    transpose copy sits on the per-call path.

    conv_a_w: (r, D), conv_a_b: (r,), conv_b_w: (D, r), conv_b_b: (D,).
    Returns wa: (D, r), ba: (1, r) f32, wb: (r, D), bb: (1, D) f32."""
    wa = jnp.asarray(conv_a_w, dtype).T
    wb = jnp.asarray(conv_b_w, dtype).T
    ba = jnp.asarray(conv_a_b, jnp.float32).reshape(1, -1)
    bb = jnp.asarray(conv_b_b, jnp.float32).reshape(1, -1)
    return wa, ba, wb, bb


def rep_adapter(x, wa, ba, wb, bb, *, scale=1.0):
    """RepAdapter forward (eval mode, groups=1).
    x: (B, L, D) in the model dtype (f32 or bf16).  wa/ba/wb/bb from
    prepare_rep_adapter_params.  Returns (B, L, D) in x.dtype."""
    B, L, D = x.shape
    r = wa.shape[1]
    M = B * L
    x2 = x.reshape(M, D)

    # Lane-dense output: pad D up to a multiple of 128 so stores are unmasked.
    # Padded x columns hit zero-padded Wa rows, so results are unchanged.
    Dp = _round_up(D, _LANE)
    if Dp != D:
        pad = Dp - D
        x2 = jnp.pad(x2, ((0, 0), (0, pad)))
        wa = jnp.pad(wa, ((0, pad), (0, 0)))
        wb = jnp.pad(wb, ((0, 0), (0, pad)))
        bb = jnp.pad(bb, ((0, 0), (0, pad)))

    # Weights in the model dtype (bf16 stays bf16 on the MXU); biases stay f32
    # and are added to the f32 accumulator inside the kernel.
    wa = wa.astype(x.dtype)
    wb = wb.astype(x.dtype)

    tm = _choose_tm(M, x.dtype, Dp, r)
    grid = (pl.cdiv(M, tm),)

    out = pl.pallas_call(
        functools.partial(_rep_adapter_kernel, scale=float(scale)),
        out_shape=jax.ShapeDtypeStruct((M, Dp), x.dtype),
        grid=grid,
        in_specs=[
            pl.BlockSpec((tm, Dp), lambda i: (i, 0)),   # x tile (pipelined)
            pl.BlockSpec((Dp, r), lambda i: (0, 0)),    # Wa (resident)
            pl.BlockSpec((1, r), lambda i: (0, 0)),     # ba (resident)
            pl.BlockSpec((r, Dp), lambda i: (0, 0)),    # Wb (resident)
            pl.BlockSpec((1, Dp), lambda i: (0, 0)),    # bb (resident)
        ],
        out_specs=pl.BlockSpec((tm, Dp), lambda i: (i, 0)),
        compiler_params=pltpu.CompilerParams(
            # Row tiles are independent: shards across v7x's 2 TensorCores.
            dimension_semantics=("parallel",),
            # Above v5e's 16 MiB / v6e's 32 MiB defaults, headroom under v7x's
            # 64 MiB physical VMEM.
            vmem_limit_bytes=_VMEM_BUDGET + (8 << 20),
        ),
    )(x2, wa, ba, wb, bb)

    if Dp != D:
        out = out[:, :D]
    return out.reshape(B, L, D)


def init_rep_adapter_params(key, model_dim, hidden_dim):
    """Deterministic Xavier-uniform weights, zero biases (matches __init__),
    in PyTorch Conv1d layout (1x1 kernel squeezed)."""
    r = hidden_dim
    k_a, k_b = jax.random.split(key)
    bound_a = (6.0 / (model_dim + r)) ** 0.5
    conv_a_w = jax.random.uniform(k_a, (r, model_dim), jnp.float32,
                                  minval=-bound_a, maxval=bound_a)
    conv_a_b = jnp.zeros((r,), jnp.float32)
    bound_b = (6.0 / (r + model_dim)) ** 0.5
    conv_b_w = jax.random.uniform(k_b, (model_dim, r), jnp.float32,
                                  minval=-bound_b, maxval=bound_b)
    conv_b_b = jnp.zeros((model_dim,), jnp.float32)
    return conv_a_w, conv_a_b, conv_b_w, conv_b_b


def _reference(x, conv_a_w, conv_a_b, conv_b_w, conv_b_b, scale):
    """Pure-JAX reference of the PyTorch forward (eval mode, groups=1)."""
    xf = x.astype(jnp.float32)
    h = jnp.einsum("bld,rd->blr", xf, conv_a_w.astype(jnp.float32)) + conv_a_b
    y = jnp.einsum("blr,dr->bld", h, conv_b_w.astype(jnp.float32)) + conv_b_b
    return (y * scale + xf).astype(x.dtype)


if __name__ == "__main__":
    scale = 0.5
    key = jax.random.PRNGKey(0)
    k_x1, k_x2, k_p = jax.random.split(key, 3)

    D, R = 256, 64  # lane-aligned model dim, bottleneck width
    conv_a_w, conv_a_b, conv_b_w, conv_b_b = init_rep_adapter_params(k_p, D, R)
    wa, ba, wb, bb = prepare_rep_adapter_params(conv_a_w, conv_a_b,
                                                conv_b_w, conv_b_b)

    # --- test 1: small single-tile case (B=2, L=8) --------------------------
    x1 = jax.random.normal(k_x1, (2, 8, D), jnp.float32)
    out1 = jax.block_until_ready(rep_adapter(x1, wa, ba, wb, bb, scale=scale))
    ref1 = _reference(x1, conv_a_w, conv_a_b, conv_b_w, conv_b_b, scale)
    assert out1.shape == x1.shape
    assert jnp.allclose(out1, ref1, atol=5e-4, rtol=5e-4)

    # --- test 2: multi-tile grid with a partial last row tile (M=2080) ------
    x2 = jax.random.normal(k_x2, (2, 1040, D), jnp.float32)
    out2 = jax.block_until_ready(rep_adapter(x2, wa, ba, wb, bb, scale=scale))
    ref2 = _reference(x2, conv_a_w, conv_a_b, conv_b_w, conv_b_b, scale)
    assert jnp.allclose(out2, ref2, atol=5e-4, rtol=5e-4)

    # --- test 3: bf16 end-to-end (activations + weights stay bf16 on MXU) ---
    caw16 = conv_a_w.astype(jnp.bfloat16)
    cbw16 = conv_b_w.astype(jnp.bfloat16)
    wa16, ba16, wb16, bb16 = prepare_rep_adapter_params(
        caw16, conv_a_b, cbw16, conv_b_b, dtype=jnp.bfloat16)
    x3 = x1.astype(jnp.bfloat16)
    out3 = jax.block_until_ready(rep_adapter(x3, wa16, ba16, wb16, bb16,
                                             scale=scale))
    ref3 = _reference(x3, caw16, conv_a_b, cbw16, conv_b_b, scale)
    assert out3.dtype == jnp.bfloat16
    assert jnp.allclose(out3.astype(jnp.float32), ref3.astype(jnp.float32),
                        atol=0.15, rtol=0.15)

    print("KERNEL_OK")
</pallas_src>

<mosaic_0001>
module attributes {stable_mosaic.version = 11 : i64} {
  func.func @_rep_adapter_kernel(%arg0: i32, %arg1: memref<16x256xf32, #tpu.memory_space<vmem>>, %arg2: memref<256x64xf32, #tpu.memory_space<vmem>>, %arg3: memref<1x64xf32, #tpu.memory_space<vmem>>, %arg4: memref<64x256xf32, #tpu.memory_space<vmem>>, %arg5: memref<1x256xf32, #tpu.memory_space<vmem>>, %arg6: memref<16x256xf32, #tpu.memory_space<vmem>>) attributes {dimension_semantics = [#tpu.dimension_semantics<parallel>], iteration_bounds = array<i64: 1>, scalar_prefetch = 0 : i64, scratch_operands = 0 : i64, tpu.core_type = #tpu.core_type<tc>, window_params = [{transform_indices = @transform_0, window_bounds = array<i64: 16, 256>}, {pipeline_mode = #tpu.pipeline_mode<synchronous>, transform_indices = @transform_1, window_bounds = array<i64: 256, 64>}, {pipeline_mode = #tpu.pipeline_mode<synchronous>, transform_indices = @transform_2, window_bounds = array<i64: 1, 64>}, {pipeline_mode = #tpu.pipeline_mode<synchronous>, transform_indices = @transform_3, window_bounds = array<i64: 64, 256>}, {pipeline_mode = #tpu.pipeline_mode<synchronous>, transform_indices = @transform_4, window_bounds = array<i64: 1, 256>}, {transform_indices = @transform_5, window_bounds = array<i64: 16, 256>}]} {
    %c0 = arith.constant 0 : index
    %c0_0 = arith.constant 0 : index
    %0 = vector.load %arg1[%c0, %c0_0] : memref<16x256xf32, #tpu.memory_space<vmem>>, vector<16x256xf32>
    %c0_1 = arith.constant 0 : index
    %c0_2 = arith.constant 0 : index
    %1 = vector.load %arg2[%c0_1, %c0_2] : memref<256x64xf32, #tpu.memory_space<vmem>>, vector<256x64xf32>
    %cst = arith.constant dense<0.000000e+00> : vector<16x64xf32>
    %2 = tpu.matmul %0, %1, %cst {dimension_numbers = #tpu.dot_dimension_numbers<[1], [0], [0], [1], [0, 0, 1, 1], [], []>} : vector<16x256xf32>, vector<256x64xf32>, vector<16x64xf32> -> vector<16x64xf32>
    %c0_3 = arith.constant 0 : index
    %c0_4 = arith.constant 0 : index
    %3 = vector.load %arg3[%c0_3, %c0_4] : memref<1x64xf32, #tpu.memory_space<vmem>>, vector<1x64xf32>
    %4 = vector.broadcast %3 : vector<1x64xf32> to vector<16x64xf32>
    %5 = arith.addf %2, %4 : vector<16x64xf32>
    %c0_5 = arith.constant 0 : index
    %c0_6 = arith.constant 0 : index
    %6 = vector.load %arg4[%c0_5, %c0_6] : memref<64x256xf32, #tpu.memory_space<vmem>>, vector<64x256xf32>
    %cst_7 = arith.constant dense<0.000000e+00> : vector<16x256xf32>
    %7 = tpu.matmul %5, %6, %cst_7 {dimension_numbers = #tpu.dot_dimension_numbers<[1], [0], [0], [1], [0, 0, 1, 1], [], []>} : vector<16x64xf32>, vector<64x256xf32>, vector<16x256xf32> -> vector<16x256xf32>
    %c0_8 = arith.constant 0 : index
    %c0_9 = arith.constant 0 : index
    %8 = vector.load %arg5[%c0_8, %c0_9] : memref<1x256xf32, #tpu.memory_space<vmem>>, vector<1x256xf32>
    %9 = vector.broadcast %8 : vector<1x256xf32> to vector<16x256xf32>
    %10 = arith.addf %7, %9 : vector<16x256xf32>
    %cst_10 = arith.constant 5.000000e-01 : f32
    %11 = vector.broadcast %cst_10 : f32 to vector<16x256xf32>
    %12 = arith.mulf %10, %11 : vector<16x256xf32>
    %13 = arith.addf %12, %0 : vector<16x256xf32>
    %c0_11 = arith.constant 0 : index
    %c0_12 = arith.constant 0 : index
    %14 = vector.load %arg6[%c0_11, %c0_12] : memref<16x256xf32, #tpu.memory_space<vmem>>, vector<16x256xf32>
    tpu.vector_store %arg6[%c0_11, %c0_12], %13 {strides = array<i32>} : memref<16x256xf32, #tpu.memory_space<vmem>>, vector<16x256xf32>,
    return
  }
  func.func @transform_0(%arg0: i32) -> (i32, i32) {
    %c0_i32 = arith.constant 0 : i32
    %c0_i32_0 = arith.constant 0 : i32
    return %arg0, %c0_i32 : i32, i32
  }
  func.func @transform_1(%arg0: i32) -> (i32, i32) {
    %c0_i32 = arith.constant 0 : i32
    %c0_i32_0 = arith.constant 0 : i32
    %c0_i32_1 = arith.constant 0 : i32
    return %c0_i32, %c0_i32_0 : i32, i32
  }
  func.func @transform_2(%arg0: i32) -> (i32, i32) {
    %c0_i32 = arith.constant 0 : i32
    %c0_i32_0 = arith.constant 0 : i32
    %c0_i32_1 = arith.constant 0 : i32
    return %c0_i32, %c0_i32_0 : i32, i32
  }
  func.func @transform_3(%arg0: i32) -> (i32, i32) {
    %c0_i32 = arith.constant 0 : i32
    %c0_i32_0 = arith.constant 0 : i32
    %c0_i32_1 = arith.constant 0 : i32
    return %c0_i32, %c0_i32_0 : i32, i32
  }
  func.func @transform_4(%arg0: i32) -> (i32, i32) {
    %c0_i32 = arith.constant 0 : i32
    %c0_i32_0 = arith.constant 0 : i32
    %c0_i32_1 = arith.constant 0 : i32
    return %c0_i32, %c0_i32_0 : i32, i32
  }
  func.func @transform_5(%arg0: i32) -> (i32, i32) {
    %c0_i32 = arith.constant 0 : i32
    %c0_i32_0 = arith.constant 0 : i32
    return %arg0, %c0_i32 : i32, i32
  }
}

</mosaic_0001>

<llo_original>
// kernel: tpu_custom_call.1
$region0: #{tpu_custom_call.1}
  #allocation0 [shape = 'u32[]', space=smem, size = 0x4, offset = 0x4, fixed_abs, tag = 'smem constant byte address 0x4 - core index']
  #allocation1 [shape = 'u32[144,128]{1,0:T(1,128)}', space=vmem, size = 0x12000, scoped, tag = 'internal scratch']
  %s0 = inlined_call_operand.vmem [shape: f32[16,256], index: 0, kind: input, shape index: {}]
  %s1 = inlined_call_operand.vmem [shape: f32[256,64], index: 1, kind: input, shape index: {}]
  %s2 = inlined_call_operand.vmem [shape: f32[1,64], index: 2, kind: input, shape index: {}]
  %s3 = inlined_call_operand.vmem [shape: f32[64,256], index: 3, kind: input, shape index: {}]
  %s4 = inlined_call_operand.vmem [shape: f32[1,256], index: 4, kind: input, shape index: {}]
  %s5 = inlined_call_operand.hbm [shape: f32[16,256], index: 5, kind: output, shape index: {}]
  %s6 = sld [smem:[#allocation0]]
  $region30: #{tpu_custom_call.1} parent=0
    _
  %s8 = ssub.s32 1, %s6
  %s9 = scalar_select 0, %s8, %s6
  $region1: #{tpu_custom_call.1} parent=0
    #allocation2 [shape = 'u8[16384]{0}', space=vmem, size = 0x4000, scoped, tag = 'output window, operand 0, single buffered']
    #allocation3 [shape = 's32[1]{0}', space=sflag, size = 0x4, scoped, tag = 'scoped memory for tpu_custom_call.1']
    %10 = vsyncpa [#allocation3], 0
    // Predicated region
    $region2: #{tpu_custom_call.1} parent=1 // pred_check
      _
    $region3: #{tpu_custom_call.1} parent=1 // pred_check_branch
      %12 = sbr.rel (0) target = $region5
    $region4: #{tpu_custom_call.1} parent=1 // pred_region
      _
    $region5: #{tpu_custom_call.1} parent=1 // pred_fallthru
      _
    // Predicated region
    $region6: #{tpu_custom_call.1} parent=1 // pred_check
      _
    $region7: #{tpu_custom_call.1} parent=1 // pred_check_branch
      %14 = sbr.rel (0) target = $region9
    $region8: #{tpu_custom_call.1} parent=1 // pred_region
      _
    $region9: #{tpu_custom_call.1} parent=1 // pred_fallthru
      _
    // Predicated region
    $region10: #{tpu_custom_call.1} parent=1 // pred_check
      _
    $region11: #{tpu_custom_call.1} parent=1 // pred_check_branch
      %16 = sbr.rel (0) target = $region13
    $region12: #{tpu_custom_call.1} parent=1 // pred_region
      _
    $region13: #{tpu_custom_call.1} parent=1 // pred_fallthru
      _
    // Predicated region
    $region14: #{tpu_custom_call.1} parent=1 // pred_check
      _
    $region15: #{tpu_custom_call.1} parent=1 // pred_check_branch
      %18 = sbr.rel (0) target = $region17
    $region16: #{tpu_custom_call.1} parent=1 // pred_region
      _
    $region17: #{tpu_custom_call.1} parent=1 // pred_fallthru
      _
    // Predicated region
    $region18: #{tpu_custom_call.1} parent=1 // pred_check
      _
    $region19: #{tpu_custom_call.1} parent=1 // pred_check_branch
      %20 = sbr.rel (0) target = $region21
    $region20: #{tpu_custom_call.1} parent=1 // pred_region
      _
    $region21: #{tpu_custom_call.1} parent=1 // pred_fallthru
      _
    %v21 = vld [vmem:[%s0] sm:$0xff]
    %v22 = vld [vmem:[%s0 + $0x8] sm:$0xff]
    %v23 = vld [vmem:[%s0 + $0x10] sm:$0xff]
    %v24 = vld [vmem:[%s0 + $0x18] sm:$0xff]
    %v25 = vld [vmem:[%s1] sm:$0xff]
    %v26 = vld [vmem:[%s1 + $0x8] sm:$0xff]
    %v27 = vld [vmem:[%s1 + $0x10] sm:$0xff]
    %v28 = vld [vmem:[%s1 + $0x18] sm:$0xff]
    %v29 = vld [vmem:[%s1 + $0x20] sm:$0xff]
    %v30 = vld [vmem:[%s1 + $0x28] sm:$0xff]
    %v31 = vld [vmem:[%s1 + $0x30] sm:$0xff]
    %v32 = vld [vmem:[%s1 + $0x38] sm:$0xff]
    %v33 = vld [vmem:[%s1 + $0x40] sm:$0xff]
    %v34 = vld [vmem:[%s1 + $0x48] sm:$0xff]
    %v35 = vld [vmem:[%s1 + $0x50] sm:$0xff]
    %v36 = vld [vmem:[%s1 + $0x58] sm:$0xff]
    %v37 = vld [vmem:[%s1 + $0x60] sm:$0xff]
    %v38 = vld [vmem:[%s1 + $0x68] sm:$0xff]
    %v39 = vld [vmem:[%s1 + $0x70] sm:$0xff]
    %v40 = vld [vmem:[%s1 + $0x78] sm:$0xff]
    %v41 = vld [vmem:[%s1 + $0x80] sm:$0xff]
    %v42 = vld [vmem:[%s1 + $0x88] sm:$0xff]
    %v43 = vld [vmem:[%s1 + $0x90] sm:$0xff]
    %v44 = vld [vmem:[%s1 + $0x98] sm:$0xff]
    %v45 = vld [vmem:[%s1 + $0xa0] sm:$0xff]
    %v46 = vld [vmem:[%s1 + $0xa8] sm:$0xff]
    %v47 = vld [vmem:[%s1 + $0xb0] sm:$0xff]
    %v48 = vld [vmem:[%s1 + $0xb8] sm:$0xff]
    %v49 = vld [vmem:[%s1 + $0xc0] sm:$0xff]
    %v50 = vld [vmem:[%s1 + $0xc8] sm:$0xff]
    %v51 = vld [vmem:[%s1 + $0xd0] sm:$0xff]
    %v52 = vld [vmem:[%s1 + $0xd8] sm:$0xff]
    %v53 = vld [vmem:[%s1 + $0xe0] sm:$0xff]
    %v54 = vld [vmem:[%s1 + $0xe8] sm:$0xff]
    %v55 = vld [vmem:[%s1 + $0xf0] sm:$0xff]
    %v56 = vld [vmem:[%s1 + $0xf8] sm:$0xff]
    %v57 = vld [vmem:[%s2] sm:$0x1]
    %v59 = vlaneseq
    %v60 = vshrl.u32 %v59, 7
    %v61 = vsub.s32 0, %v60
    %v62 = vrot.slane %v57, %v61
    %64 = vmatprep.subr.mxu0 0.0
    %65 = vmatpush1.msra.mxu0 %v25
    %66 = vmatprep.subr.mxu0 0.0
    %67 = vmatpush1.msra.mxu0 %v26
    %68 = vmatprep.subr.mxu0 0.0
    %69 = vmatpush1.msra.mxu0 %v27
    %70 = vmatprep.subr.mxu0 0.0
    %71 = vmatpush1.msra.mxu0 %v28
    %72 = vmatprep.subr.mxu0 0.0
    %73 = vmatpush1.msra.mxu0 %v29
    %74 = vmatprep.subr.mxu0 0.0
    %75 = vmatpush1.msra.mxu0 %v30
    %76 = vmatprep.subr.mxu0 0.0
    %77 = vmatpush1.msra.mxu0 %v31
    %78 = vmatprep.subr.mxu0 0.0
    %79 = vmatpush1.msra.mxu0 %v32
    %80 = vmatprep.subr.mxu0 0.0
    %81 = vmatpush1.msra.mxu0 %v33
    %82 = vmatprep.subr.mxu0 0.0
    %83 = vmatpush1.msra.mxu0 %v34
    %84 = vmatprep.subr.mxu0 0.0
    %85 = vmatpush1.msra.mxu0 %v35
    %86 = vmatprep.subr.mxu0 0.0
    %87 = vmatpush1.msra.mxu0 %v36
    %88 = vmatprep.subr.mxu0 0.0
    %89 = vmatpush1.msra.mxu0 %v37
    %90 = vmatprep.subr.mxu0 0.0
    %91 = vmatpush1.msra.mxu0 %v38
    %92 = vmatprep.subr.mxu0 0.0
    %93 = vmatpush1.msra.mxu0 %v39
    %94 = vmatprep.subr.mxu0 0.0
    %95 = vmatpush1.msra.mxu0 %v40
    %96 = vmatprep.subr.mxu0 0.0
    %97 = vmatpush1.msra.mxu0 %v41
    %98 = vmatprep.subr.mxu0 0.0
    %99 = vmatpush1.msra.mxu0 %v42
    %100 = vmatprep.subr.mxu0 0.0
    %101 = vmatpush1.msra.mxu0 %v43
    %102 = vmatprep.subr.mxu0 0.0
    %103 = vmatpush1.msra.mxu0 %v44
    %104 = vmatprep.subr.mxu0 0.0
    %105 = vmatpush1.msra.mxu0 %v45
    %106 = vmatprep.subr.mxu0 0.0
    %107 = vmatpush1.msra.mxu0 %v46
    %108 = vmatprep.subr.mxu0 0.0
    %109 = vmatpush1.msra.mxu0 %v47
    %110 = vmatprep.subr.mxu0 0.0
    %111 = vmatpush1.msra.mxu0 %v48
    %112 = vmatprep.subr.mxu0 0.0
    %113 = vmatpush1.msra.mxu0 %v49
    %114 = vmatprep.subr.mxu0 0.0
    %115 = vmatpush1.msra.mxu0 %v50
    %116 = vmatprep.subr.mxu0 0.0
    %117 = vmatpush1.msra.mxu0 %v51
    %118 = vmatprep.subr.mxu0 0.0
    %119 = vmatpush1.msra.mxu0 %v52
    %120 = vmatprep.subr.mxu0 0.0
    %121 = vmatpush1.msra.mxu0 %v53
    %122 = vmatprep.subr.mxu0 0.0
    %123 = vmatpush1.msra.mxu0 %v54
    %124 = vmatprep.subr.mxu0 0.0
    %125 = vmatpush1.msra.mxu0 %v55
    %126 = vmatprep.subr.mxu0 0.0
    %127 = vmatpush1.msra.mxu0 %v56
    %128 = vmatprep.mubr.f32.mxu0 %v22
    %129 = vmatmul.mubr.f32.gmra.mrb[0].mxu0 %v21
    %v130 = vpop.f32.mrb[0].mxu0
    %v131 = vadd.f32 %v62, %v130
    %v132 = vpop.f32.mrb[0].mxu0
    %133 = vmatprep.mubr.f32.mxu0 %v24
    %134 = vmatmul.mubr.f32.gmra.mrb[0].mxu0 %v23
    %v135 = vpop.f32.mrb[0].mxu0
    %v136 = vadd.f32 %v62, %v135
    %v137 = vpop.f32.mrb[0].mxu0
    %138 = vdwg.mxu0
    %v139 = vld [vmem:[%s3] sm:$0xff]
    %v140 = vld [vmem:[%s3 + $0x8] sm:$0xff]
    %v141 = vld [vmem:[%s3 + $0x10] sm:$0xff]
    %v142 = vld [vmem:[%s3 + $0x18] sm:$0xff]
    %v143 = vld [vmem:[%s3 + $0x20] sm:$0xff]
    %v144 = vld [vmem:[%s3 + $0x28] sm:$0xff]
    %v145 = vld [vmem:[%s3 + $0x30] sm:$0xff]
    %v146 = vld [vmem:[%s3 + $0x38] sm:$0xff]
    %v147 = vld [vmem:[%s3 + $0x40] sm:$0xff]
    %v148 = vld [vmem:[%s3 + $0x48] sm:$0xff]
    %v149 = vld [vmem:[%s3 + $0x50] sm:$0xff]
    %v150 = vld [vmem:[%s3 + $0x58] sm:$0xff]
    %v151 = vld [vmem:[%s3 + $0x60] sm:$0xff]
    %v152 = vld [vmem:[%s3 + $0x68] sm:$0xff]
    %v153 = vld [vmem:[%s3 + $0x70] sm:$0xff]
    %v154 = vld [vmem:[%s3 + $0x78] sm:$0xff]
    %v155 = vld [vmem:[%s4] sm:$0x3]
    %v157 = vlaneseq
    %v158 = vshrl.u32 %v157, 7
    %v159 = vsub.s32 0, %v158
    %v160 = vrot.slane %v155, %v159
    %v161 = vlaneseq
    %v162 = vshrl.u32 %v161, 7
    %v163 = vsub.s32 1, %v162
    %v164 = vrot.slane %v155, %v163
    %vm167 = vcmask 523264
    %v169 = vsel %vm167, %v131, 0
    %v172 = vsel %vm167, %v136, 0
    %174 = vmatprep.subr.mxu0 %v140
    %175 = vmatpush1.msra.mxu0 %v139
    %176 = vmatprep.subr.mxu0 %v142
    %177 = vmatpush1.msra.mxu0 %v141
    %178 = vmatprep.subr.mxu0 %v144
    %179 = vmatpush1.msra.mxu0 %v143
    %180 = vmatprep.subr.mxu0 %v146
    %181 = vmatpush1.msra.mxu0 %v145
    %182 = vmatprep.subr.mxu0 %v148
    %183 = vmatpush1.msra.mxu0 %v147
    %184 = vmatprep.subr.mxu0 %v150
    %185 = vmatpush1.msra.mxu0 %v149
    %186 = vmatprep.subr.mxu0 %v152
    %187 = vmatpush1.msra.mxu0 %v151
    %188 = vmatprep.subr.mxu0 %v154
    %189 = vmatpush1.msra.mxu0 %v153
    %190 = vmatprep.subr.mxu0 0.0
    %191 = vmatpush1.msra.mxu0 0.0
    %192 = vmatprep.subr.mxu0 0.0
    %193 = vmatpush1.msra.mxu0 0.0
    %194 = vmatprep.subr.mxu0 0.0
    %195 = vmatpush1.msra.mxu0 0.0
    %196 = vmatprep.subr.mxu0 0.0
    %197 = vmatpush1.msra.mxu0 0.0
    %198 = vmatprep.subr.mxu0 0.0
    %199 = vmatpush1.msra.mxu0 0.0
    %200 = vmatprep.subr.mxu0 0.0
    %201 = vmatpush1.msra.mxu0 0.0
    %202 = vmatprep.subr.mxu0 0.0
    %203 = vmatpush1.msra.mxu0 0.0
    %204 = vmatprep.subr.mxu0 0.0
    %205 = vmatpush1.msra.mxu0 0.0
    %206 = vmatprep.subr.mxu0 0.0
    %207 = vmatpush1.msra.mxu0 0.0
    %208 = vmatprep.subr.mxu0 0.0
    %209 = vmatpush1.msra.mxu0 0.0
    %210 = vmatprep.subr.mxu0 0.0
    %211 = vmatpush1.msra.mxu0 0.0
    %212 = vmatprep.subr.mxu0 0.0
    %213 = vmatpush1.msra.mxu0 0.0
    %214 = vmatprep.subr.mxu0 0.0
    %215 = vmatpush1.msra.mxu0 0.0
    %216 = vmatprep.subr.mxu0 0.0
    %217 = vmatpush1.msra.mxu0 0.0
    %218 = vmatprep.subr.mxu0 0.0
    %219 = vmatpush1.msra.mxu0 0.0
    %220 = vmatprep.subr.mxu0 0.0
    %221 = vmatpush1.msra.mxu0 0.0
    %222 = vmatprep.subr.mxu0 0.0
    %223 = vmatpush1.msra.mxu0 0.0
    %224 = vmatprep.subr.mxu0 0.0
    %225 = vmatpush1.msra.mxu0 0.0
    %226 = vmatprep.subr.mxu0 0.0
    %227 = vmatpush1.msra.mxu0 0.0
    %228 = vmatprep.subr.mxu0 0.0
    %229 = vmatpush1.msra.mxu0 0.0
    %230 = vmatprep.subr.mxu0 0.0
    %231 = vmatpush1.msra.mxu0 0.0
    %232 = vmatprep.subr.mxu0 0.0
    %233 = vmatpush1.msra.mxu0 0.0
    %234 = vmatprep.subr.mxu0 0.0
    %235 = vmatpush1.msra.mxu0 0.0
    %236 = vmatprep.subr.mxu0 0.0
    %237 = vmatpush1.msra.mxu0 0.0
    %238 = vmatprep.mubr.f32.mxu0 0.0
    %239 = vmatmul.mubr.f32.gmra.mrb[0].mxu0 %v169
    %v240 = vpop.f32.mrb[0].mxu0
    %v241 = vadd.f32 %v160, %v240
    %v242 = vpop.f32.mrb[0].mxu0
    %v243 = vadd.f32 %v164, %v242
    %244 = vmatprep.mubr.f32.mxu0 0.0
    %245 = vmatmul.mubr.f32.gmra.mrb[0].mxu0 %v172
    %v246 = vpop.f32.mrb[0].mxu0
    %v247 = vadd.f32 %v160, %v246
    %v248 = vpop.f32.mrb[0].mxu0
    %v249 = vadd.f32 %v164, %v248
    %250 = vdwg.mxu0
    %v251 = vmul.f32 %v241, 0.5
    %v252 = vmul.f32 %v243, 0.5
    %v253 = vmul.f32 %v247, 0.5
    %v254 = vmul.f32 %v249, 0.5
    %v255 = vadd.f32 %v251, %v21
    %v256 = vadd.f32 %v252, %v22
    %v257 = vadd.f32 %v253, %v23
    %v258 = vadd.f32 %v254, %v24
    %259 = vst [vmem:[#allocation2] sm:$0xff] %v255
    %260 = vst [vmem:[#allocation2 + $0x8] sm:$0xff] %v256
    %261 = vst [vmem:[#allocation2 + $0x10] sm:$0xff] %v257
    %262 = vst [vmem:[#allocation2 + $0x18] sm:$0xff] %v258
    // Predicated region
    $region22: #{tpu_custom_call.1} parent=1 // pred_check
      _
    $region23: #{tpu_custom_call.1} parent=1 // pred_check_branch
      %264 = sbr.rel (0) target = $region25
    $region24: #{tpu_custom_call.1} parent=1 // pred_region
      %s266 = ssub.s32 512, 512
      %267 = vsyncadd [#allocation3], %s266
      %s268 = sshll.u32 [#allocation2], 4
      %s269 = int_to_ptr.vmem [resolvable:$true] %s268
      %274 = dma.vmem_to_hbm [thread:$0]  %s269, 512, %s5, [#allocation3], 256, 256, 16
    $region25: #{tpu_custom_call.1} parent=1 // pred_fallthru
      _
    // Predicated region
    $region26: #{tpu_custom_call.1} parent=1 // pred_check
      _
    $region27: #{tpu_custom_call.1} parent=1 // pred_check_branch
      %276 = sbr.rel (0) target = $region29
    $region28: #{tpu_custom_call.1} parent=1 // pred_region
      %277 = dma.done [#allocation3], 512
    $region29: #{tpu_custom_call.1} parent=1 // pred_fallthru
      _
    %278 = vsyncpa [#allocation3], 1

</llo_original>
